<compile_context>
chip_gen: v7x
topology: tpu7x:2x2x1
jax: 0.10.0
libtpu: 0.0.40
codegen_flags: <defaults>
</compile_context>

<pallas_src>
import math

import jax
import jax.numpy as jnp
from jax import lax
from jax.experimental import pallas as pl
from jax.experimental.pallas import tpu as pltpu


def _matmul_bias_kernel(a_ref, w_ref, b_ref, o_ref):
    # a_ref: (TM, CKK)    bf16 im2col rows of this tile (streamed)
    # w_ref: (CKK, OPAD)  bf16 conv weight (constant index_map -> VMEM resident)
    # b_ref: (PP, OPAD)   f32 conv bias + positional bias per output pixel
    # o_ref: (TM, OPAD)   f32 lane-dense output tile
    tm = a_ref.shape[0]
    pp, o_pad = b_ref.shape
    acc = jnp.dot(a_ref[...], w_ref[...], preferred_element_type=jnp.float32)
    # Rows are ordered (image, pixel); tm is a multiple of PP, so the bias
    # phase repeats every PP rows -> broadcast instead of materializing a
    # (tm, o_pad) slab.
    acc = acc.reshape(tm // pp, pp, o_pad) + b_ref[...][None, :, :]
    o_ref[...] = acc.reshape(tm, o_pad).astype(o_ref.dtype)


def pixel_embed_forward(x, weight, bias, position, *, stride, tm_rows=2048):
    """x: (B,N,C,PH,PW) f32; weight: (O,C,K,K); bias: (O,); position: (1,O,P,P).

    Returns (B, N, P*P, O) float32, matching PixelEmbed.forward.
    """
    B, N, C, PH, PW = x.shape
    O, Cw, K, Kw = weight.shape
    assert Cw == C and Kw == K
    P = position.shape[-1]
    assert position.shape == (1, O, P, P)
    # Conv VALID output must match the positional table (required by the add).
    assert (PH - K) // stride + 1 == P and (PW - K) // stride + 1 == P

    BN = B * N
    PP = P * P
    CKK = C * K * K
    M = BN * PP

    # ---- patch extraction (wrapper): one XLA conv, no gather / 6-D transpose.
    # conv_general_dilated_patches feature ordering is channel-major
    # (c*K*K + u*K + v), which matches weight.reshape(O, C*K*K).
    # TODO(synk): fully in-kernel im2col from a raw-pixel VMEM block (K*K
    # strided slices into a 256-lane-padded scratch) would also remove this
    # HBM round trip; kept in the wrapper for robustness.
    xr = x.reshape(BN, C, PH, PW).astype(jnp.bfloat16)
    patches = lax.conv_general_dilated_patches(
        xr, filter_shape=(K, K), window_strides=(stride, stride),
        padding="VALID", dimension_numbers=("NCHW", "OIHW", "NHWC"))
    patches = patches.reshape(M, CKK)                                # bf16

    # weight (O,C,K,K) -> (CKK, O), zero-padded to a full 128-lane width.
    o_pad = ((O + 127) // 128) * 128
    w_mat = weight.reshape(O, CKK).T
    w_mat = jnp.pad(w_mat, ((0, 0), (0, o_pad - O))).astype(jnp.bfloat16)

    # per-pixel bias: conv bias + position[0, :, i, j] for pixel pp = i*P + j
    pos_rows = jnp.transpose(position[0], (1, 2, 0)).reshape(PP, O)  # (PP, O)
    bias_rows = jnp.pad(pos_rows + bias[None, :], ((0, 0), (0, o_pad - O)))

    # Row-tile size: multiple of PP (bias phase aligns) and of 8 (sublanes).
    # Take the largest requested tile, but keep >= 2 row tiles so v7x's two
    # TensorCores both get work under dimension_semantics=("parallel",).
    unit = (PP * 8) // math.gcd(PP, 8)                  # lcm(PP, 8)
    tm = max(unit, (tm_rows // unit) * unit)
    half = (M // 2) // unit * unit
    if half >= unit:
        tm = min(tm, half)

    m_pad = pl.cdiv(M, tm) * tm
    if m_pad != M:
        patches = jnp.pad(patches, ((0, m_pad - M), (0, 0)))

    cost = pl.CostEstimate(
        # flops use o_pad because the padded lanes really are executed.
        flops=2 * m_pad * CKK * o_pad,
        transcendentals=0,
        bytes_accessed=(2 * m_pad * CKK          # bf16 patch rows
                        + 2 * CKK * o_pad        # bf16 weight
                        + 4 * PP * o_pad         # f32 bias block
                        + 4 * m_pad * o_pad))    # f32 output

    out = pl.pallas_call(
        _matmul_bias_kernel,
        out_shape=jax.ShapeDtypeStruct((m_pad, o_pad), jnp.float32),
        grid_spec=pltpu.PrefetchScalarGridSpec(
            num_scalar_prefetch=0,
            grid=(m_pad // tm,),
            in_specs=[
                pl.BlockSpec((tm, CKK), lambda i: (i, 0)),      # streamed rows
                pl.BlockSpec((CKK, o_pad), lambda i: (0, 0)),   # resident weight
                pl.BlockSpec((PP, o_pad), lambda i: (0, 0)),    # resident bias
            ],
            out_specs=pl.BlockSpec((tm, o_pad), lambda i: (i, 0)),
        ),
        compiler_params=pltpu.CompilerParams(
            dimension_semantics=("parallel",)),
        cost_estimate=cost,
    )(patches, w_mat, bias_rows)

    # drop row / lane padding, reshape to the PyTorch output layout
    return out[:M, :O].reshape(B, N, PP, O)


if __name__ == "__main__":
    # module defaults: patch_size=16, in_chans=3, out_chans=48, kernel_size=7
    patch_size, in_chans, out_chans, kernel_size = 16, 3, 48, 7
    stride = math.ceil(kernel_size / 2)               # 4
    out_patch_size = math.ceil(patch_size / stride)   # 4
    # input patch side so the VALID conv emits exactly out_patch_size pixels
    ph = (out_patch_size - 1) * stride + kernel_size  # 19
    B, N = 2, 8

    key = jax.random.PRNGKey(0)
    kx, kw, kb, kp = jax.random.split(key, 4)
    x = jax.random.normal(kx, (B, N, in_chans, ph, ph), dtype=jnp.float32)
    weight = jax.random.normal(
        kw, (out_chans, in_chans, kernel_size, kernel_size),
        dtype=jnp.float32) * 0.05
    bias = jax.random.normal(kb, (out_chans,), dtype=jnp.float32) * 0.02
    position = jax.random.truncated_normal(
        kp, -2.0, 2.0, (1, out_chans, out_patch_size, out_patch_size),
        dtype=jnp.float32) * 0.02

    out = pixel_embed_forward(x, weight, bias, position, stride=stride)
    out = jax.block_until_ready(out)

    # pure-JAX f32 reference of the PyTorch forward.
    # Tolerance is loosened (5e-2) because the Pallas path streams the patch
    # rows and weight in bfloat16 (f32 accumulation) per the perf review.
    xr = x.reshape(B * N, in_chans, ph, ph)
    y = lax.conv_general_dilated(
        xr, weight, window_strides=(stride, stride), padding="VALID",
        dimension_numbers=("NCHW", "OIHW", "NCHW"),
        precision=lax.Precision.HIGHEST)
    y = y + bias[None, :, None, None] + position
    ref = y.reshape(B, N, out_chans, out_patch_size ** 2).transpose(0, 1, 3, 2)

    assert out.shape == (B, N, out_patch_size ** 2, out_chans)
    assert jnp.allclose(out, ref, atol=5e-2, rtol=5e-2), \
        "Pallas PixelEmbed mismatch vs reference"
    print("KERNEL_OK")
</pallas_src>

<mosaic_0001>
module attributes {stable_mosaic.version = 11 : i64} {
  func.func @_matmul_bias_kernel(%arg0: i32, %arg1: memref<128x147xbf16, #tpu.memory_space<vmem>>, %arg2: memref<147x128xbf16, #tpu.memory_space<vmem>>, %arg3: memref<16x128xf32, #tpu.memory_space<vmem>>, %arg4: memref<128x128xf32, #tpu.memory_space<vmem>>) attributes {dimension_semantics = [#tpu.dimension_semantics<parallel>], iteration_bounds = array<i64: 2>, scalar_prefetch = 0 : i64, scratch_operands = 0 : i64, tpu.core_type = #tpu.core_type<tc>, window_params = [{transform_indices = @transform_0, window_bounds = array<i64: 128, 147>}, {pipeline_mode = #tpu.pipeline_mode<synchronous>, transform_indices = @transform_1, window_bounds = array<i64: 147, 128>}, {pipeline_mode = #tpu.pipeline_mode<synchronous>, transform_indices = @transform_2, window_bounds = array<i64: 16, 128>}, {transform_indices = @transform_3, window_bounds = array<i64: 128, 128>}]} {
    %c0 = arith.constant 0 : index
    %c0_0 = arith.constant 0 : index
    %0 = vector.load %arg1[%c0, %c0_0] : memref<128x147xbf16, #tpu.memory_space<vmem>>, vector<128x147xbf16>
    %c0_1 = arith.constant 0 : index
    %c0_2 = arith.constant 0 : index
    %1 = vector.load %arg2[%c0_1, %c0_2] : memref<147x128xbf16, #tpu.memory_space<vmem>>, vector<147x128xbf16>
    %cst = arith.constant dense<0.000000e+00> : vector<128x128xf32>
    %2 = tpu.matmul %0, %1, %cst {dimension_numbers = #tpu.dot_dimension_numbers<[1], [0], [0], [1], [0, 0, 1, 1], [], []>} : vector<128x147xbf16>, vector<147x128xbf16>, vector<128x128xf32> -> vector<128x128xf32>
    %3 = vector.shape_cast %2 : vector<128x128xf32> to vector<8x16x128xf32>
    %c0_3 = arith.constant 0 : index
    %c0_4 = arith.constant 0 : index
    %4 = vector.load %arg3[%c0_3, %c0_4] : memref<16x128xf32, #tpu.memory_space<vmem>>, vector<16x128xf32>
    %5 = vector.shape_cast %4 : vector<16x128xf32> to vector<1x16x128xf32>
    %6 = vector.broadcast %5 : vector<1x16x128xf32> to vector<8x16x128xf32>
    %7 = arith.addf %3, %6 : vector<8x16x128xf32>
    %8 = vector.shape_cast %7 : vector<8x16x128xf32> to vector<128x128xf32>
    %c0_5 = arith.constant 0 : index
    %c0_6 = arith.constant 0 : index
    %9 = vector.load %arg4[%c0_5, %c0_6] : memref<128x128xf32, #tpu.memory_space<vmem>>, vector<128x128xf32>
    tpu.vector_store %arg4[%c0_5, %c0_6], %8 {strides = array<i32>} : memref<128x128xf32, #tpu.memory_space<vmem>>, vector<128x128xf32>,
    return
  }
  func.func @transform_0(%arg0: i32) -> (i32, i32) {
    %c0_i32 = arith.constant 0 : i32
    %c0_i32_0 = arith.constant 0 : i32
    return %arg0, %c0_i32 : i32, i32
  }
  func.func @transform_1(%arg0: i32) -> (i32, i32) {
    %c0_i32 = arith.constant 0 : i32
    %c0_i32_0 = arith.constant 0 : i32
    %c0_i32_1 = arith.constant 0 : i32
    return %c0_i32, %c0_i32_0 : i32, i32
  }
  func.func @transform_2(%arg0: i32) -> (i32, i32) {
    %c0_i32 = arith.constant 0 : i32
    %c0_i32_0 = arith.constant 0 : i32
    %c0_i32_1 = arith.constant 0 : i32
    return %c0_i32, %c0_i32_0 : i32, i32
  }
  func.func @transform_3(%arg0: i32) -> (i32, i32) {
    %c0_i32 = arith.constant 0 : i32
    %c0_i32_0 = arith.constant 0 : i32
    return %arg0, %c0_i32 : i32, i32
  }
}

</mosaic_0001>

<llo_original>
// kernel: tpu_custom_call.1
$region0: #{tpu_custom_call.1}
  #allocation0 [shape = 'u32[]', space=smem, size = 0x4, offset = 0x4, fixed_abs, tag = 'smem constant byte address 0x4 - core index']
  #allocation1 [shape = 'u32[144,128]{1,0:T(1,128)}', space=vmem, size = 0x12000, scoped, tag = 'internal scratch']
  %s0 = inlined_call_operand.vmem [shape: bf16[256,147], index: 0, kind: input, shape index: {}]
  %s1 = inlined_call_operand.vmem [shape: bf16[147,128], index: 1, kind: input, shape index: {}]
  %s2 = inlined_call_operand.vmem [shape: f32[16,128], index: 2, kind: input, shape index: {}]
  %s3 = inlined_call_operand.hbm [shape: f32[256,128], index: 3, kind: output, shape index: {}]
  %s4 = sld [smem:[#allocation0]]
  $region45: #{tpu_custom_call.1} parent=0
    _
  %s6 = ssub.s32 1, %s4
  %s7 = scalar_select 0, %s6, %s4
  $region1: #{tpu_custom_call.1} parent=0
    #allocation2 [shape = 'u8[131072]{0}', space=vmem, size = 0x20000, scoped, tag = 'output window, operand 0']
    #allocation3 [shape = 's32[2]{0}', space=sflag, size = 0x8, scoped, tag = 'scoped memory for tpu_custom_call.1']
    %8 = vsyncpa [#allocation3], 0
    %s9 = scalar_lea.sflag [#allocation3], 1
    %10 = vsyncpa %s9, 0
    loop: start=0, step=1, limit=4
    $region2: #{tpu_custom_call.1} parent=1 // loop_pre_header
      _
    $region3: #{tpu_custom_call.1} parent=1 // loop_header
      %s12 = sphi 0, %s16
      %p13 = scmp.ge.s32.totalorder %s12, 4
      %s22 = sphi 0, %s24
      %s25 = sphi 0, %s22
      %s26 = sphi 0, %s25
      %s42 = sphi 0, %s26
      %s46 = sphi 0, %s46
      %s48 = sphi 0, %s46
      %s49 = sphi 0, %s48
      %s63 = sphi 0, %s49
      %s67 = sphi 0, %s67
      %s69 = sphi 0, %s67
      %s70 = sphi 0, %s69
      %s84 = sphi 0, %s70
      %s90 = sphi 0, %s92
      %s93 = sphi 0, %s90
      %s94 = sphi 0, %s93
      %s110 = sphi 0, %s94
    $region4: #{tpu_custom_call.1} parent=1 // loop_header_branch
      %15 = sbr.rel (%p13) target = $region8
    $region5: #{tpu_custom_call.1} parent=1 // loop_body
      %s17 = ssub.s32 %s12, 1
      %s18 = ssub.s32 %s12, 2
      %s19 = sadd.s32 %s12, 1
      %s20 = ssub.s32 %s12, %s19
      %p21 = scmp.eq.s32.totalorder %s20, 0
      %s23 = sadd.s32 %s22, 1
      %s24 = scalar_select %p21, %s22, %s23
      %p27 = pneg %p21
      %p28 = scmp.eq.s32.totalorder %s12, 1
      %p29 = por %p27, %p28
      %p30 = scmp.ne.s32.totalorder %s22, %s25
      %p31 = scmp.eq.s32.totalorder %s12, 0
      %p32 = por %p30, %p31
      %p33 = scmp.ne.s32.totalorder %s22, %s25
      %p34 = scmp.eq.s32.totalorder %s17, 1
      %p35 = por %p33, %p34
      %p36 = scmp.ne.s32.totalorder %s25, %s26
      %p37 = scmp.eq.s32.totalorder %s17, 0
      %p38 = por %p36, %p37
      %p39 = scmp.ne.s32.totalorder %s25, %s26
      %p40 = scmp.eq.s32.totalorder %s18, 1
      %p41 = por %p39, %p40
      %p43 = scmp.ne.s32.totalorder %s26, %s42
      %p44 = scmp.eq.s32.totalorder %s18, 0
      %p45 = por %p43, %p44
      %s47 = sadd.s32 %s46, 1
      %p50 = scmp.eq.s32.totalorder %s12, 1
      %p51 = scmp.ne.s32.totalorder %s46, %s48
      %p52 = scmp.eq.s32.totalorder %s12, 0
      %p53 = por %p51, %p52
      %p54 = scmp.ne.s32.totalorder %s46, %s48
      %p55 = scmp.eq.s32.totalorder %s17, 1
      %p56 = por %p54, %p55
      %p57 = scmp.ne.s32.totalorder %s48, %s49
      %p58 = scmp.eq.s32.totalorder %s17, 0
      %p59 = por %p57, %p58
      %p60 = scmp.ne.s32.totalorder %s48, %s49
      %p61 = scmp.eq.s32.totalorder %s18, 1
      %p62 = por %p60, %p61
      %p64 = scmp.ne.s32.totalorder %s49, %s63
      %p65 = scmp.eq.s32.totalorder %s18, 0
      %p66 = por %p64, %p65
      %s68 = sadd.s32 %s67, 1
      %p71 = scmp.eq.s32.totalorder %s12, 1
      %p72 = scmp.ne.s32.totalorder %s67, %s69
      %p73 = scmp.eq.s32.totalorder %s12, 0
      %p74 = por %p72, %p73
      %p75 = scmp.ne.s32.totalorder %s67, %s69
      %p76 = scmp.eq.s32.totalorder %s17, 1
      %p77 = por %p75, %p76
      %p78 = scmp.ne.s32.totalorder %s69, %s70
      %p79 = scmp.eq.s32.totalorder %s17, 0
      %p80 = por %p78, %p79
      %p81 = scmp.ne.s32.totalorder %s69, %s70
      %p82 = scmp.eq.s32.totalorder %s18, 1
      %p83 = por %p81, %p82
      %p85 = scmp.ne.s32.totalorder %s70, %s84
      %p86 = scmp.eq.s32.totalorder %s18, 0
      %p87 = por %p85, %p86
      %s88 = ssub.s32 %s12, %s19
      %p89 = scmp.eq.s32.totalorder %s88, 0
      %s91 = sadd.s32 %s90, 1
      %s92 = scalar_select %p89, %s90, %s91
      %p95 = pneg %p89
      %p96 = scmp.eq.s32.totalorder %s12, 1
      %p97 = por %p95, %p96
      %p98 = scmp.ne.s32.totalorder %s90, %s93
      %p99 = scmp.eq.s32.totalorder %s12, 0
      %p100 = por %p98, %p99
      %p101 = scmp.ne.s32.totalorder %s90, %s93
      %p102 = scmp.eq.s32.totalorder %s17, 1
      %p103 = por %p101, %p102
      %p104 = scmp.ne.s32.totalorder %s93, %s94
      %p105 = scmp.eq.s32.totalorder %s17, 0
      %p106 = por %p104, %p105
      %p107 = scmp.ne.s32.totalorder %s93, %s94
      %p108 = scmp.eq.s32.totalorder %s18, 1
      %p109 = por %p107, %p108
      %p111 = scmp.ne.s32.totalorder %s94, %s110
      %p112 = scmp.eq.s32.totalorder %s18, 0
      %p113 = por %p111, %p112
      %p114 = scmp.le.s32.totalorder 1, %s12
      %p115 = scmp.lt.s32.totalorder %s12, 3
      %p116 = pnand %p114, %p115
      %p117 = pneg %p116
      // Predicated region
      $region9: #{tpu_custom_call.1} parent=5 // pred_check
        _
      $region10: #{tpu_custom_call.1} parent=5 // pred_check_branch
        %119 = sbr.rel (%p116) target = $region12
      $region11: #{tpu_custom_call.1} parent=5 // pred_region
        %s120 = ssub.s32 %s12, 1
        // Predicated region
        $region13: #{tpu_custom_call.1} parent=11 // pred_check
          %p121 = pneg %p59
        $region14: #{tpu_custom_call.1} parent=11 // pred_check_branch
          %123 = sbr.rel (%p121) target = $region16
        $region15: #{tpu_custom_call.1} parent=11 // pred_region
          _
        $region16: #{tpu_custom_call.1} parent=11 // pred_fallthru
          _
        // Predicated region
        $region17: #{tpu_custom_call.1} parent=11 // pred_check
          %p124 = pneg %p80
        $region18: #{tpu_custom_call.1} parent=11 // pred_check_branch
          %126 = sbr.rel (%p124) target = $region20
        $region19: #{tpu_custom_call.1} parent=11 // pred_region
          _
        $region20: #{tpu_custom_call.1} parent=11 // pred_fallthru
          _
      $region12: #{tpu_custom_call.1} parent=5 // pred_fallthru
        _
      %p127 = scmp.lt.s32.totalorder %s12, 2
      // Predicated region
      $region21: #{tpu_custom_call.1} parent=5 // pred_check
        %p128 = pneg %p127
      $region22: #{tpu_custom_call.1} parent=5 // pred_check_branch
        %130 = sbr.rel (%p128) target = $region24
      $region23: #{tpu_custom_call.1} parent=5 // pred_region
        // Predicated region
        $region25: #{tpu_custom_call.1} parent=23 // pred_check
          %p131 = pneg %p32
        $region26: #{tpu_custom_call.1} parent=23 // pred_check_branch
          %133 = sbr.rel (%p131) target = $region28
        $region27: #{tpu_custom_call.1} parent=23 // pred_region
          %s134 = smul.u32 16, %s12
          %p135 = scmp.lt.s32.totalorder %s134, 31
          %s136 = scalar_select %p135, %s134, 31
          %s137 = smul.addr %s136, 2
          %s138 = smul.addr %s137, 4
          %s139 = scalar_lea.vmem %s0, %s138
          %s140 = smul.u32 16, %s12
        $region28: #{tpu_custom_call.1} parent=23 // pred_fallthru
          _
      $region24: #{tpu_custom_call.1} parent=5 // pred_fallthru
        _
      %p141 = scmp.le.s32.totalorder 1, %s12
      %p142 = scmp.lt.s32.totalorder %s12, 3
      %p143 = pnand %p141, %p142
      %p144 = pneg %p143
      // Predicated region
      $region29: #{tpu_custom_call.1} parent=5 // pred_check
        _
      $region30: #{tpu_custom_call.1} parent=5 // pred_check_branch
        %146 = sbr.rel (%p143) target = $region32
      $region31: #{tpu_custom_call.1} parent=5 // pred_region
        %s147 = ssub.s32 %s12, 1
        %s148 = smul.u32 16, %s17
        %p149 = scmp.lt.s32.totalorder %s148, 31
        %s150 = scalar_select %p149, %s148, 31
        %s151 = smul.addr %s150, 2
        %s152 = smul.addr %s151, 4
        %s153 = scalar_lea.vmem %s0, %s152
        %p154 = pneg %p38
        %p155 = pneg %p35
        %p156 = pneg %p59
        %p157 = pneg %p56
        %p158 = pneg %p80
        %p159 = pneg %p77
        %p160 = pneg %p106
        %p161 = pneg %p103
        %s162 = sand.u32 %s93, 1
        %s163 = scalar_lea.sflag [#allocation3], %s162
        %s164 = sand.u32 %s93, 1
        %s165 = smul.addr %s164, 128
        %s166 = scalar_lea.vmem [#allocation2], %s165
        %s167 = smul.u32 16, %s17
        %p168 = scmp.lt.s32.totalorder %s167, 31
        %s169 = scalar_select %p168, %s167, 31
        %s170 = smul.addr %s169, 2
        %s171 = smul.addr %s170, 4
        %s172 = scalar_lea.vmem %s0, %s171
        %s173 = smul.u32 16, %s17
        %s174 = smul.u32 16, %s17
        %v176 = vld [vmem:[%s172] sm:$0xff]
        %v177 = vld [vmem:[%s172 + $0x8] sm:$0xff]
        %v178 = vld [vmem:[%s172 + $0x10] sm:$0xff]
        %v179 = vld [vmem:[%s172 + $0x18] sm:$0xff]
        %v180 = vld [vmem:[%s172 + $0x20] sm:$0xff]
        %v181 = vld [vmem:[%s172 + $0x28] sm:$0xff]
        %v182 = vld [vmem:[%s172 + $0x30] sm:$0xff]
        %v183 = vld [vmem:[%s172 + $0x38] sm:$0xff]
        %v184 = vld [vmem:[%s172 + $0x40] sm:$0xff]
        %v185 = vld [vmem:[%s172 + $0x48] sm:$0xff]
        %v186 = vld [vmem:[%s172 + $0x50] sm:$0xff]
        %v187 = vld [vmem:[%s172 + $0x58] sm:$0xff]
        %v188 = vld [vmem:[%s172 + $0x60] sm:$0xff]
        %v189 = vld [vmem:[%s172 + $0x68] sm:$0xff]
        %v190 = vld [vmem:[%s172 + $0x70] sm:$0xff]
        %v191 = vld [vmem:[%s172 + $0x78] sm:$0xff]
        %v192 = vld [vmem:[%s1] sm:$0xf]
        %v193 = vld [vmem:[%s1 + $0x4] sm:$0xf]
        %v194 = vld [vmem:[%s1 + $0x8] sm:$0xf]
        %v195 = vld [vmem:[%s1 + $0xc] sm:$0xf]
        %v196 = vld [vmem:[%s1 + $0x10] sm:$0xf]
        %v197 = vld [vmem:[%s1 + $0x14] sm:$0xf]
        %v198 = vld [vmem:[%s1 + $0x18] sm:$0xf]
        %v199 = vld [vmem:[%s1 + $0x1c] sm:$0xf]
        %v200 = vld [vmem:[%s1 + $0x20] sm:$0xf]
        %v201 = vld [vmem:[%s1 + $0x24] sm:$0xf]
        %v202 = vld [vmem:[%s1 + $0x28] sm:$0xf]
        %v203 = vld [vmem:[%s1 + $0x2c] sm:$0xf]
        %v204 = vld [vmem:[%s1 + $0x30] sm:$0xf]
        %v205 = vld [vmem:[%s1 + $0x34] sm:$0xf]
        %v206 = vld [vmem:[%s1 + $0x38] sm:$0xf]
        %v207 = vld [vmem:[%s1 + $0x3c] sm:$0xf]
        %v208 = vld [vmem:[%s1 + $0x40] sm:$0xf]
        %v209 = vld [vmem:[%s1 + $0x44] sm:$0xf]
        %v210 = vld [vmem:[%s1 + $0x48] sm:$0x3]
        %v227 = vunpack.c.l.b16 %v176
        %v228 = vunpack.c.h.b16 %v176
        %v229 = vunpack.c.l.b16 %v177
        %v230 = vunpack.c.h.b16 %v177
        %v231 = vunpack.c.l.b16 %v178
        %v232 = vunpack.c.h.b16 %v178
        %v233 = vunpack.c.l.b16 %v179
        %v234 = vunpack.c.h.b16 %v179
        %v235 = vunpack.c.l.b16 %v180
        %v236 = vunpack.c.h.b16 %v180
        %v237 = vunpack.c.l.b16 %v181
        %v238 = vunpack.c.h.b16 %v181
        %v239 = vunpack.c.l.b16 %v182
        %v240 = vunpack.c.h.b16 %v182
        %v241 = vunpack.c.l.b16 %v183
        %v242 = vunpack.c.h.b16 %v183
        %v243 = vunpack.c.l.b16 %v184
        %v244 = vunpack.c.h.b16 %v184
        %v245 = vunpack.c.l.b16 %v185
        %v246 = vunpack.c.h.b16 %v185
        %v247 = vunpack.c.l.b16 %v186
        %v248 = vunpack.c.h.b16 %v186
        %v249 = vunpack.c.l.b16 %v187
        %v250 = vunpack.c.h.b16 %v187
        %v251 = vunpack.c.l.b16 %v188
        %v252 = vunpack.c.h.b16 %v188
        %v253 = vunpack.c.l.b16 %v189
        %v254 = vunpack.c.h.b16 %v189
        %v255 = vunpack.c.l.b16 %v190
        %v256 = vunpack.c.h.b16 %v190
        %v257 = vunpack.c.l.b16 %v191
        %v258 = vunpack.c.h.b16 %v191
        %v259 = vpack.c.b16 %v229, %v227
        %v260 = vpack.c.b16 %v230, %v228
        %v261 = vpack.c.b16 %v233, %v231
        %v262 = vpack.c.b16 %v234, %v232
        %v263 = vpack.c.b16 %v237, %v235
        %v264 = vpack.c.b16 %v238, %v236
        %v265 = vpack.c.b16 %v241, %v239
        %v266 = vpack.c.b16 %v242, %v240
        %v267 = vpack.c.b16 %v245, %v243
        %v268 = vpack.c.b16 %v246, %v244
        %v269 = vpack.c.b16 %v249, %v247
        %v270 = vpack.c.b16 %v250, %v248
        %v271 = vpack.c.b16 %v253, %v251
        %v272 = vpack.c.b16 %v254, %v252
        %v273 = vpack.c.b16 %v257, %v255
        %v274 = vpack.c.b16 %v258, %v256
        %v302 = vunpack.c.l.b16 %v192
        %v303 = vunpack.c.l.b16 %v193
        %v304 = vunpack.c.l.b16 %v194
        %v305 = vunpack.c.l.b16 %v195
        %v306 = vunpack.c.l.b16 %v196
        %v307 = vunpack.c.l.b16 %v197
        %v308 = vunpack.c.l.b16 %v198
        %v309 = vunpack.c.l.b16 %v199
        %v310 = vunpack.c.l.b16 %v200
        %v311 = vunpack.c.l.b16 %v201
        %v312 = vunpack.c.l.b16 %v202
        %v313 = vunpack.c.l.b16 %v203
        %v314 = vunpack.c.l.b16 %v204
        %v315 = vunpack.c.l.b16 %v205
        %v316 = vunpack.c.l.b16 %v206
        %v317 = vunpack.c.l.b16 %v207
        %v318 = vunpack.c.l.b16 %v208
        %v319 = vunpack.c.l.b16 %v209
        %v320 = vunpack.c.l.b16 %v210
        %v321 = vpack.c.b16 %v303, %v302
        %v322 = vpack.c.b16 %v305, %v304
        %v323 = vpack.c.b16 %v307, %v306
        %v324 = vpack.c.b16 %v309, %v308
        %v325 = vpack.c.b16 %v311, %v310
        %v326 = vpack.c.b16 %v313, %v312
        %v327 = vpack.c.b16 %v315, %v314
        %v328 = vpack.c.b16 %v317, %v316
        %v329 = vpack.c.b16 %v319, %v318
        %v330 = vpack.c.b16 %v320, %v320
        %vm340 = vcmask 154624
        %v342 = vsel %vm340, %v260, 0
        %v345 = vsel %vm340, %v262, 0
        %v348 = vsel %vm340, %v264, 0
        %v351 = vsel %vm340, %v266, 0
        %v354 = vsel %vm340, %v268, 0
        %v357 = vsel %vm340, %v270, 0
        %v360 = vsel %vm340, %v272, 0
        %v363 = vsel %vm340, %v274, 0
        %vm365 = vcmask 1040384
        %vm366 = vcmask 1041408
        %v367 = vsel %vm365, 4294967295, 65535
        %v368 = vsel %vm366, %v367, 0
        %v370 = vand.u32 %v330, %v368
        %372 = vmatprep.subr.bf16.mxu0 0
        %373 = vmatpush1.bf16.msra.mxu0 %v321
        %374 = vmatprep.subr.bf16.mxu0 0
        %375 = vmatpush1.bf16.msra.mxu0 %v322
        %376 = vmatprep.subr.bf16.mxu0 0
        %377 = vmatpush1.bf16.msra.mxu0 %v323
        %378 = vmatprep.subr.bf16.mxu0 0
        %379 = vmatpush1.bf16.msra.mxu0 %v324
        %380 = vmatprep.subr.bf16.mxu0 0
        %381 = vmatpush1.bf16.msra.mxu0 %v325
        %382 = vmatprep.subr.bf16.mxu0 0
        %383 = vmatpush1.bf16.msra.mxu0 %v326
        %384 = vmatprep.subr.bf16.mxu0 0
        %385 = vmatpush1.bf16.msra.mxu0 %v327
        %386 = vmatprep.subr.bf16.mxu0 0
        %387 = vmatpush1.bf16.msra.mxu0 %v328
        %388 = vmatprep.subr.bf16.mxu0 0
        %389 = vmatpush1.bf16.msra.mxu0 %v329
        %390 = vmatprep.subr.bf16.mxu0 0
        %391 = vmatpush1.bf16.msra.mxu0 %v370
        %392 = vmatprep.subr.bf16.mxu0 0
        %393 = vmatpush1.bf16.msra.mxu0 0
        %394 = vmatprep.subr.bf16.mxu0 0
        %395 = vmatpush1.bf16.msra.mxu0 0
        %396 = vmatprep.subr.bf16.mxu0 0
        %397 = vmatpush1.bf16.msra.mxu0 0
        %398 = vmatprep.subr.bf16.mxu0 0
        %399 = vmatpush1.bf16.msra.mxu0 0
        %400 = vmatprep.subr.bf16.mxu0 0
        %401 = vmatpush1.bf16.msra.mxu0 0
        %402 = vmatprep.subr.bf16.mxu0 0
        %403 = vmatpush1.bf16.msra.mxu0 0
        %404 = vmatprep.mubr.bf16.mxu0 %v342
        %405 = vmatmul.mubr.bf16.gmra.mrb[0].mxu0 %v259
        %v406 = vpop.f32.mrb[0].mxu0
        %v407 = vadd.f32 0.0, %v406
        %v408 = vpop.f32.mrb[0].mxu0
        %v409 = vpop.f32.mrb[0].mxu0
        %v410 = vadd.f32 0.0, %v409
        %v411 = vpop.f32.mrb[0].mxu0
        %412 = vmatprep.mubr.bf16.mxu0 %v345
        %413 = vmatmul.mubr.bf16.gmra.mrb[0].mxu0 %v261
        %v414 = vpop.f32.mrb[0].mxu0
        %v415 = vadd.f32 0.0, %v414
        %v416 = vpop.f32.mrb[0].mxu0
        %v417 = vpop.f32.mrb[0].mxu0
        %v418 = vadd.f32 0.0, %v417
        %v419 = vpop.f32.mrb[0].mxu0
        %420 = vmatprep.mubr.bf16.mxu0 %v348
        %421 = vmatmul.mubr.bf16.gmra.mrb[0].mxu0 %v263
        %v422 = vpop.f32.mrb[0].mxu0
        %v423 = vadd.f32 0.0, %v422
        %v424 = vpop.f32.mrb[0].mxu0
        %v425 = vpop.f32.mrb[0].mxu0
        %v426 = vadd.f32 0.0, %v425
        %v427 = vpop.f32.mrb[0].mxu0
        %428 = vmatprep.mubr.bf16.mxu0 %v351
        %429 = vmatmul.mubr.bf16.gmra.mrb[0].mxu0 %v265
        %v430 = vpop.f32.mrb[0].mxu0
        %v431 = vadd.f32 0.0, %v430
        %v432 = vpop.f32.mrb[0].mxu0
        %v433 = vpop.f32.mrb[0].mxu0
        %v434 = vadd.f32 0.0, %v433
        %v435 = vpop.f32.mrb[0].mxu0
        %436 = vmatprep.mubr.bf16.mxu0 %v354
        %437 = vmatmul.mubr.bf16.gmra.mrb[0].mxu0 %v267
        %v438 = vpop.f32.mrb[0].mxu0
        %v439 = vadd.f32 0.0, %v438
        %v440 = vpop.f32.mrb[0].mxu0
        %v441 = vpop.f32.mrb[0].mxu0
        %v442 = vadd.f32 0.0, %v441
        %v443 = vpop.f32.mrb[0].mxu0
        %444 = vmatprep.mubr.bf16.mxu0 %v357
        %445 = vmatmul.mubr.bf16.gmra.mrb[0].mxu0 %v269
        %v446 = vpop.f32.mrb[0].mxu0
        %v447 = vadd.f32 0.0, %v446
        %v448 = vpop.f32.mrb[0].mxu0
        %v449 = vpop.f32.mrb[0].mxu0
        %v450 = vadd.f32 0.0, %v449
        %v451 = vpop.f32.mrb[0].mxu0
        %452 = vmatprep.mubr.bf16.mxu0 %v360
        %453 = vmatmul.mubr.bf16.gmra.mrb[0].mxu0 %v271
        %v454 = vpop.f32.mrb[0].mxu0
        %v455 = vadd.f32 0.0, %v454
        %v456 = vpop.f32.mrb[0].mxu0
        %v457 = vpop.f32.mrb[0].mxu0
        %v458 = vadd.f32 0.0, %v457
        %v459 = vpop.f32.mrb[0].mxu0
        %460 = vmatprep.mubr.bf16.mxu0 %v363
        %461 = vmatmul.mubr.bf16.gmra.mrb[0].mxu0 %v273
        %v462 = vpop.f32.mrb[0].mxu0
        %v463 = vadd.f32 0.0, %v462
        %v464 = vpop.f32.mrb[0].mxu0
        %v465 = vpop.f32.mrb[0].mxu0
        %v466 = vadd.f32 0.0, %v465
        %v467 = vpop.f32.mrb[0].mxu0
        %468 = vdwg.mxu0
        %v469 = vld [vmem:[%s2] sm:$0xff]
        %v470 = vld [vmem:[%s2 + $0x8] sm:$0xff]
        %v471 = vadd.f32 %v407, %v469
        %v472 = vadd.f32 %v410, %v470
        %v473 = vadd.f32 %v415, %v469
        %v474 = vadd.f32 %v418, %v470
        %v475 = vadd.f32 %v423, %v469
        %v476 = vadd.f32 %v426, %v470
        %v477 = vadd.f32 %v431, %v469
        %v478 = vadd.f32 %v434, %v470
        %v479 = vadd.f32 %v439, %v469
        %v480 = vadd.f32 %v442, %v470
        %v481 = vadd.f32 %v447, %v469
        %v482 = vadd.f32 %v450, %v470
        %v483 = vadd.f32 %v455, %v469
        %v484 = vadd.f32 %v458, %v470
        %v485 = vadd.f32 %v463, %v469
        %v486 = vadd.f32 %v466, %v470
        %487 = vst [vmem:[%s166] sm:$0xff] %v471
        %488 = vst [vmem:[%s166 + $0x8] sm:$0xff] %v472
        %489 = vst [vmem:[%s166 + $0x10] sm:$0xff] %v473
        %490 = vst [vmem:[%s166 + $0x18] sm:$0xff] %v474
        %491 = vst [vmem:[%s166 + $0x20] sm:$0xff] %v475
        %492 = vst [vmem:[%s166 + $0x28] sm:$0xff] %v476
        %493 = vst [vmem:[%s166 + $0x30] sm:$0xff] %v477
        %494 = vst [vmem:[%s166 + $0x38] sm:$0xff] %v478
        %495 = vst [vmem:[%s166 + $0x40] sm:$0xff] %v479
        %496 = vst [vmem:[%s166 + $0x48] sm:$0xff] %v480
        %497 = vst [vmem:[%s166 + $0x50] sm:$0xff] %v481
        %498 = vst [vmem:[%s166 + $0x58] sm:$0xff] %v482
        %499 = vst [vmem:[%s166 + $0x60] sm:$0xff] %v483
        %500 = vst [vmem:[%s166 + $0x68] sm:$0xff] %v484
        %501 = vst [vmem:[%s166 + $0x70] sm:$0xff] %v485
        %502 = vst [vmem:[%s166 + $0x78] sm:$0xff] %v486
        %s503 = sand.u32 %s93, 1
        %s504 = scalar_lea.sflag [#allocation3], %s503
        %s505 = sand.u32 %s93, 1
        %s506 = smul.addr %s505, 128
        %s507 = scalar_lea.vmem [#allocation2], %s506
        // Predicated region
        $region33: #{tpu_custom_call.1} parent=31 // pred_check
          %p508 = pneg %p103
        $region34: #{tpu_custom_call.1} parent=31 // pred_check_branch
          %510 = sbr.rel (%p508) target = $region36
        $region35: #{tpu_custom_call.1} parent=31 // pred_region
          %s511 = smul.u32 16, %s17
          %s513 = ssub.s32 2048, 2048
          %514 = vsyncadd %s504, %s513
          %s515 = smul.addr %s511, 128
          %s516 = scalar_lea.hbm %s3, %s515
          %s517 = sshll.u32 %s507, 4
          %s518 = int_to_ptr.vmem [resolvable:$true] %s517
          %523 = dma.vmem_to_hbm [thread:$0]  %s518, 2048, %s516, %s504, 128, 128, 8
        $region36: #{tpu_custom_call.1} parent=31 // pred_fallthru
          _
      $region32: #{tpu_custom_call.1} parent=5 // pred_fallthru
        _
      %p524 = scmp.le.s32.totalorder 2, %s12
      // Predicated region
      $region37: #{tpu_custom_call.1} parent=5 // pred_check
        %p525 = pneg %p524
      $region38: #{tpu_custom_call.1} parent=5 // pred_check_branch
        %527 = sbr.rel (%p525) target = $region40
      $region39: #{tpu_custom_call.1} parent=5 // pred_region
        %s528 = ssub.s32 %s12, 2
        // Predicated region
        $region41: #{tpu_custom_call.1} parent=39 // pred_check
          %p529 = pneg %p109
        $region42: #{tpu_custom_call.1} parent=39 // pred_check_branch
          %531 = sbr.rel (%p529) target = $region44
        $region43: #{tpu_custom_call.1} parent=39 // pred_region
          %s532 = sand.u32 %s94, 1
          %s533 = scalar_lea.sflag [#allocation3], %s532
          %s534 = sand.u32 %s94, 1
          %s535 = smul.addr %s534, 128
          %s536 = scalar_lea.vmem [#allocation2], %s535
          %537 = dma.done %s533, 2048
        $region44: #{tpu_custom_call.1} parent=39 // pred_fallthru
          _
      $region40: #{tpu_custom_call.1} parent=5 // pred_fallthru
        _
    $region6: #{tpu_custom_call.1} parent=1 // loop_footer
      %s16 = sadd.s32 1, %s12
    $region7: #{tpu_custom_call.1} parent=1 // loop_footer_branch
      %11 = sbr.rel target = $region3
    $region8: #{tpu_custom_call.1} parent=1 // loop_exit
      _
    %538 = vsyncpa [#allocation3], 1
    %s539 = scalar_lea.sflag [#allocation3], 1
    %540 = vsyncpa %s539, 1

</llo_original>
